<compile_context>
chip_gen: v7x
topology: tpu7x:2x2x1
jax: 0.10.0
libtpu: 0.0.40
codegen_flags: <defaults>
</compile_context>

<pallas_src>
import functools

import jax
import jax.numpy as jnp
from jax.experimental import pallas as pl
from jax.experimental.pallas import tpu as pltpu

_TWO_PI = 6.283185307179586
_INV_TWO_PI = 1.0 / _TWO_PI


def _wrap_sq(pred, targ):
    """(pred - targ) wrapped to [-pi, pi], then squared.  Pure VPU ops."""
    d = pred.astype(jnp.float32) - targ.astype(jnp.float32)
    # Equivalent (after squaring) to atan2(sin(d), cos(d)) ** 2, but avoids
    # pushing sin/cos/atan2 through the single EUP slot.
    w = d - _TWO_PI * jnp.round(d * _INV_TWO_PI)
    return w * w


def _circular_loss_kernel(pred_ref, targ_ref, out_ref, acc_ref, *,
                          rows, row_tile, chunks_per_slice, needs_mask):
    c = pl.program_id(0)          # slice axis (2-way only on multi-TC chips)
    i = pl.program_id(1)          # sequential chunk within the slice

    @pl.when(i == 0)
    def _():
        acc_ref[...] = jnp.zeros_like(acc_ref)

    sq = _wrap_sq(pred_ref[...], targ_ref[...])

    if needs_mask:
        # Logical (unclamped) global row index of this block's first row.
        row0 = (c * chunks_per_slice + i) * row_tile
        is_interior = row0 + row_tile <= rows

        @pl.when(is_interior)
        def _():
            # Interior blocks: no iota/compare/select, just the add tree.
            acc_ref[...] += jnp.sum(sq, axis=0, keepdims=True)

        @pl.when(jnp.logical_not(is_interior))
        def _():
            # Tail / overhang block(s) only: zero out-of-range rows.
            row_ids = row0 + jax.lax.broadcasted_iota(jnp.int32, sq.shape, 0)
            masked = jnp.where(row_ids < rows, sq, 0.0)
            acc_ref[...] += jnp.sum(masked, axis=0, keepdims=True)
    else:
        acc_ref[...] += jnp.sum(sq, axis=0, keepdims=True)

    @pl.when(i == pl.num_programs(1) - 1)
    def _():
        out_ref[...] = acc_ref[...].reshape(out_ref.shape)


def _chip_defaults():
    """(row_tile, max_slices) per chip generation; conservative fallback."""
    try:
        kind = jax.devices()[0].device_kind.lower()
    except Exception:
        kind = ""
    # 8192 rows x 128 lanes x 4 B = 4 MiB/block; 2 inputs x 2 pipeline
    # buffers = 16 MiB, inside the 32 MiB default scoped VMEM of v6e/v7x.
    # v5e's default scoped VMEM is 16 MiB, so stay at 4096 rows there.
    row_tile = 8192 if ("v6" in kind or "v7" in kind) else 4096
    # Only chips with two TensorCores behind one device benefit from a
    # 2-way "parallel" slice split; elsewhere it is a pure serial loop.
    multi_tc = ("v7" in kind) or ("v4" in kind) or ("v5p" in kind)
    return row_tile, (2 if multi_tc else 1)


def circular_loss(predictions, targets, *, row_tile=None, lane=128):
    """Circular MSE over all elements of `predictions` / `targets`."""
    assert predictions.shape == targets.shape
    n_total = predictions.size
    assert n_total > 0

    default_tile, max_slices = _chip_defaults()
    if row_tile is None:
        row_tile = default_tile

    p = predictions.reshape(-1)
    t = targets.reshape(-1)

    # < 128-element remainder: reduce it directly in the wrapper (a handful of
    # VPU ops on <= 127 elements) instead of jnp.pad-copying the full tensor.
    rem = n_total % lane
    main = n_total - rem
    if rem:
        tail_sum = jnp.sum(_wrap_sq(p[main:], t[main:]))
        # TODO(synk): the prefix slice below still materializes one copy of
        # the lane-aligned part when n % 128 != 0; a true zero-copy path would
        # need a manual-DMA (memory_space=pl.ANY) 1-D kernel.
        p = jax.lax.slice(p, (0,), (main,))
        t = jax.lax.slice(t, (0,), (main,))
    else:
        tail_sum = jnp.float32(0.0)

    denom = jnp.float32(n_total)
    if main == 0:
        return tail_sum / denom

    rows = main // lane
    p2 = p.reshape(rows, lane)
    t2 = t.reshape(rows, lane)

    eff_row_tile = min(row_tile, rows)
    total_chunks = pl.cdiv(rows, eff_row_tile)

    num_slices = max_slices if total_chunks >= 2 else 1
    chunks_per_slice = pl.cdiv(total_chunks, num_slices)
    covered = num_slices * chunks_per_slice * eff_row_tile
    needs_mask = covered != rows

    if num_slices * chunks_per_slice == total_chunks:
        def in_map(c, i):
            return (c * chunks_per_slice + i, 0)
    else:
        # Overhang chunk(s) from an odd chunk count split 2-way: clamp the DMA
        # window; the in-kernel row mask zeroes their contribution.
        def in_map(c, i):
            return (jnp.minimum(c * chunks_per_slice + i, total_chunks - 1), 0)

    kernel = functools.partial(
        _circular_loss_kernel,
        rows=rows,
        row_tile=eff_row_tile,
        chunks_per_slice=chunks_per_slice,
        needs_mask=needs_mask,
    )

    itemsize = jnp.dtype(p2.dtype).itemsize
    cost = pl.CostEstimate(
        flops=7 * main,
        transcendentals=0,
        bytes_accessed=2 * main * itemsize + num_slices * lane * 4,
    )

    partials = pl.pallas_call(
        kernel,
        out_shape=jax.ShapeDtypeStruct((num_slices, 1, lane), jnp.float32),
        grid_spec=pltpu.PrefetchScalarGridSpec(
            num_scalar_prefetch=0,
            grid=(num_slices, chunks_per_slice),
            in_specs=[
                pl.BlockSpec((eff_row_tile, lane), in_map),
                pl.BlockSpec((eff_row_tile, lane), in_map),
            ],
            out_specs=pl.BlockSpec((1, 1, lane), lambda c, i: (c, 0, 0)),
            scratch_shapes=[pltpu.VMEM((1, lane), jnp.float32)],
        ),
        compiler_params=pltpu.CompilerParams(
            # TODO(synk): on v7x verify in an xprof trace that the leading
            # 2-slice axis actually lands on both TensorCores; if not, switch
            # to pltpu.CORE_PARALLEL / pl.core_map on that axis.
            dimension_semantics=("parallel", "arbitrary")),
        cost_estimate=cost,
    )(p2, t2)

    # Single tiny cross-lane reduction + mean scaling outside the kernel.
    return (jnp.sum(partials) + tail_sum) / denom


if __name__ == "__main__":
    key = jax.random.PRNGKey(0)
    k1, k2 = jax.random.split(key)
    # Phase-like inputs in radians, NCHW-ish shape [2, 4, 16, 16].
    shape = (2, 4, 16, 16)
    predictions = jax.random.uniform(
        k1, shape, dtype=jnp.float32, minval=-3.0 * jnp.pi, maxval=3.0 * jnp.pi
    )
    targets = jax.random.uniform(
        k2, shape, dtype=jnp.float32, minval=-3.0 * jnp.pi, maxval=3.0 * jnp.pi
    )

    loss = jax.block_until_ready(circular_loss(predictions, targets))

    # Reference check in plain JAX (faithful to the torch spec).
    d = predictions - targets
    ref = jnp.mean(jnp.arctan2(jnp.sin(d), jnp.cos(d)) ** 2)
    assert jnp.allclose(loss, ref, rtol=1e-4, atol=1e-5), (loss, ref)

    print("KERNEL_OK")
</pallas_src>

<mosaic_0001>
module attributes {stable_mosaic.version = 11 : i64} {
  func.func @_circular_loss_kernel(%arg0: i32, %arg1: i32, %arg2: memref<16x128xf32, #tpu.memory_space<vmem>>, %arg3: memref<16x128xf32, #tpu.memory_space<vmem>>, %arg4: memref<1x1x128xf32, #tpu.memory_space<vmem>>, %arg5: memref<1x128xf32, #tpu.memory_space<vmem>>) attributes {dimension_semantics = [#tpu.dimension_semantics<parallel>, #tpu.dimension_semantics<arbitrary>], iteration_bounds = array<i64: 1, 1>, scalar_prefetch = 0 : i64, scratch_operands = 1 : i64, tpu.core_type = #tpu.core_type<tc>, window_params = [{transform_indices = @transform_0, window_bounds = array<i64: 16, 128>}, {transform_indices = @transform_1, window_bounds = array<i64: 16, 128>}, {transform_indices = @transform_2, window_bounds = array<i64: 1, 1, 128>}]} {
    %c0_i32 = arith.constant 0 : i32
    %0 = arith.cmpi eq, %arg1, %c0_i32 : i32
    %1 = arith.extui %0 : i1 to i32
    %c0_i32_0 = arith.constant 0 : i32
    %2 = arith.cmpi ne, %1, %c0_i32_0 : i32
    scf.if %2 {
      %cst_12 = arith.constant 0.000000e+00 : f32
      %21 = vector.broadcast %cst_12 : f32 to vector<1x128xf32>
      %c0_13 = arith.constant 0 : index
      %c0_14 = arith.constant 0 : index
      %22 = vector.load %arg5[%c0_13, %c0_14] : memref<1x128xf32, #tpu.memory_space<vmem>>, vector<1x128xf32>
      tpu.vector_store %arg5[%c0_13, %c0_14], %21 {strides = array<i32>} : memref<1x128xf32, #tpu.memory_space<vmem>>, vector<1x128xf32>,
    } else {
    }
    %c0 = arith.constant 0 : index
    %c0_1 = arith.constant 0 : index
    %3 = vector.load %arg2[%c0, %c0_1] : memref<16x128xf32, #tpu.memory_space<vmem>>, vector<16x128xf32>
    %c0_2 = arith.constant 0 : index
    %c0_3 = arith.constant 0 : index
    %4 = vector.load %arg3[%c0_2, %c0_3] : memref<16x128xf32, #tpu.memory_space<vmem>>, vector<16x128xf32>
    %5 = arith.subf %3, %4 : vector<16x128xf32>
    %cst = arith.constant 0.159154937 : f32
    %6 = vector.broadcast %cst : f32 to vector<16x128xf32>
    %7 = arith.mulf %5, %6 : vector<16x128xf32>
    %8 = math.roundeven %7 : vector<16x128xf32>
    %cst_4 = arith.constant 6.28318548 : f32
    %9 = vector.broadcast %cst_4 : f32 to vector<16x128xf32>
    %10 = arith.mulf %9, %8 : vector<16x128xf32>
    %11 = arith.subf %5, %10 : vector<16x128xf32>
    %12 = arith.mulf %11, %11 : vector<16x128xf32>
    %c0_5 = arith.constant 0 : index
    %c0_6 = arith.constant 0 : index
    %13 = vector.load %arg5[%c0_5, %c0_6] : memref<1x128xf32, #tpu.memory_space<vmem>>, vector<1x128xf32>
    %cst_7 = arith.constant dense<0.000000e+00> : vector<128xf32>
    %14 = vector.multi_reduction <add>, %12, %cst_7 [0] : vector<16x128xf32> to vector<128xf32>
    %15 = vector.shape_cast %14 : vector<128xf32> to vector<1x128xf32>
    %16 = arith.addf %13, %15 : vector<1x128xf32>
    %c0_8 = arith.constant 0 : index
    %c0_9 = arith.constant 0 : index
    %17 = vector.load %arg5[%c0_8, %c0_9] : memref<1x128xf32, #tpu.memory_space<vmem>>, vector<1x128xf32>
    tpu.vector_store %arg5[%c0_8, %c0_9], %16 {strides = array<i32>} : memref<1x128xf32, #tpu.memory_space<vmem>>, vector<1x128xf32>,
    %c0_i32_10 = arith.constant 0 : i32
    %18 = arith.cmpi eq, %arg1, %c0_i32_10 : i32
    %19 = arith.extui %18 : i1 to i32
    %c0_i32_11 = arith.constant 0 : i32
    %20 = arith.cmpi ne, %19, %c0_i32_11 : i32
    scf.if %20 {
      %c0_12 = arith.constant 0 : index
      %c0_13 = arith.constant 0 : index
      %21 = vector.load %arg5[%c0_12, %c0_13] : memref<1x128xf32, #tpu.memory_space<vmem>>, vector<1x128xf32>
      %22 = vector.shape_cast %21 : vector<1x128xf32> to vector<1x1x128xf32>
      %c0_14 = arith.constant 0 : index
      %c0_15 = arith.constant 0 : index
      %c0_16 = arith.constant 0 : index
      %23 = vector.load %arg4[%c0_14, %c0_15, %c0_16] : memref<1x1x128xf32, #tpu.memory_space<vmem>>, vector<1x1x128xf32>
      tpu.vector_store %arg4[%c0_14, %c0_15, %c0_16], %22 {strides = array<i32>} : memref<1x1x128xf32, #tpu.memory_space<vmem>>, vector<1x1x128xf32>,
    } else {
    }
    return
  }
  func.func @transform_0(%arg0: i32, %arg1: i32) -> (i32, i32) {
    %c1_i32 = arith.constant 1 : i32
    %0 = arith.muli %arg0, %c1_i32 : i32
    %1 = arith.addi %0, %arg1 : i32
    %c0_i32 = arith.constant 0 : i32
    %c0_i32_0 = arith.constant 0 : i32
    return %1, %c0_i32 : i32, i32
  }
  func.func @transform_1(%arg0: i32, %arg1: i32) -> (i32, i32) {
    %c1_i32 = arith.constant 1 : i32
    %0 = arith.muli %arg0, %c1_i32 : i32
    %1 = arith.addi %0, %arg1 : i32
    %c0_i32 = arith.constant 0 : i32
    %c0_i32_0 = arith.constant 0 : i32
    return %1, %c0_i32 : i32, i32
  }
  func.func @transform_2(%arg0: i32, %arg1: i32) -> (i32, i32, i32) {
    %c0_i32 = arith.constant 0 : i32
    %c0_i32_0 = arith.constant 0 : i32
    %c0_i32_1 = arith.constant 0 : i32
    return %arg0, %c0_i32, %c0_i32_0 : i32, i32, i32
  }
}

</mosaic_0001>

<llo_original>
// kernel: tpu_custom_call.1
$region0: #{tpu_custom_call.1}
  #allocation0 [shape = 'u32[]', space=smem, size = 0x4, offset = 0x4, fixed_abs, tag = 'smem constant byte address 0x4 - core index']
  #allocation1 [shape = 'u32[144,128]{1,0:T(1,128)}', space=vmem, size = 0x12000, scoped, tag = 'internal scratch']
  #allocation2 [shape = 'f32[1,128]{1,0:T(1,128)}', space=vmem, size = 0x200, scoped, tag = 'scratch operand']
  %s0 = inlined_call_operand.hbm [shape: f32[16,128], index: 0, kind: input, shape index: {}]
  %s1 = inlined_call_operand.hbm [shape: f32[16,128], index: 1, kind: input, shape index: {}]
  %s2 = inlined_call_operand.hbm [shape: f32[1,1,128], index: 2, kind: output, shape index: {}]
  %s3 = sld [smem:[#allocation0]]
  $region34: #{tpu_custom_call.1} parent=0
    _
  %s5 = ssub.s32 1, %s3
  %s6 = scalar_select 0, %s5, %s3
  $region1: #{tpu_custom_call.1} parent=0
    #allocation3 [shape = 'u8[8192]{0}', space=vmem, size = 0x2000, scoped, tag = 'input window, operand 0, single buffered']
    #allocation4 [shape = 's32[1]{0}', space=sflag, size = 0x4, scoped, tag = 'scoped memory for tpu_custom_call.1']
    #allocation5 [shape = 's32[1]{0}', space=sflag, size = 0x4, scoped, tag = 'scoped memory for tpu_custom_call.1']
    #allocation6 [shape = 'u8[8192]{0}', space=vmem, size = 0x2000, scoped, tag = 'input window, operand 1, single buffered']
    #allocation7 [shape = 's32[1]{0}', space=sflag, size = 0x4, scoped, tag = 'scoped memory for tpu_custom_call.1']
    #allocation8 [shape = 'u8[512]{0}', space=vmem, size = 0x400, scoped, tag = 'output window, operand 0, single buffered']
    %7 = vsyncpa [#allocation4], 0
    %8 = vsyncpa [#allocation7], 0
    %9 = vsyncpa [#allocation5], 0
    // Predicated region
    $region2: #{tpu_custom_call.1} parent=1 // pred_check
      _
    $region3: #{tpu_custom_call.1} parent=1 // pred_check_branch
      %11 = sbr.rel (0) target = $region5
    $region4: #{tpu_custom_call.1} parent=1 // pred_region
      %s12 = sadd.s32 0, 0
      %s13 = smul.u32 2, %s12
      %s15 = ssub.s32 256, 256
      %16 = vsyncadd [#allocation4], %s15
      %s17 = smul.addr %s13, 128
      %s18 = scalar_lea.hbm %s0, %s17
      %s19 = sshll.u32 [#allocation3], 4
      %s20 = int_to_ptr.vmem [resolvable:$true] %s19
      %25 = dma.hbm_to_vmem [thread:$0]  %s18, 256, %s20, [#allocation4], 128, 128, 8
    $region5: #{tpu_custom_call.1} parent=1 // pred_fallthru
      _
    // Predicated region
    $region6: #{tpu_custom_call.1} parent=1 // pred_check
      _
    $region7: #{tpu_custom_call.1} parent=1 // pred_check_branch
      %27 = sbr.rel (0) target = $region9
    $region8: #{tpu_custom_call.1} parent=1 // pred_region
      %s28 = sadd.s32 0, 0
      %s29 = smul.u32 2, %s28
      %s31 = ssub.s32 256, 256
      %32 = vsyncadd [#allocation7], %s31
      %s33 = smul.addr %s29, 128
      %s34 = scalar_lea.hbm %s1, %s33
      %s35 = sshll.u32 [#allocation6], 4
      %s36 = int_to_ptr.vmem [resolvable:$true] %s35
      %41 = dma.hbm_to_vmem [thread:$0]  %s34, 256, %s36, [#allocation7], 128, 128, 8
    $region9: #{tpu_custom_call.1} parent=1 // pred_fallthru
      _
    // Predicated region
    $region10: #{tpu_custom_call.1} parent=1 // pred_check
      _
    $region11: #{tpu_custom_call.1} parent=1 // pred_check_branch
      %43 = sbr.rel (0) target = $region13
    $region12: #{tpu_custom_call.1} parent=1 // pred_region
      %44 = dma.done [#allocation4], 256
    $region13: #{tpu_custom_call.1} parent=1 // pred_fallthru
      _
    // Predicated region
    $region14: #{tpu_custom_call.1} parent=1 // pred_check
      _
    $region15: #{tpu_custom_call.1} parent=1 // pred_check_branch
      %46 = sbr.rel (0) target = $region17
    $region16: #{tpu_custom_call.1} parent=1 // pred_region
      %47 = dma.done [#allocation7], 256
    $region17: #{tpu_custom_call.1} parent=1 // pred_fallthru
      _
    %s48 = sadd.s32 0, 0
    %s49 = smul.u32 2, %s48
    %s50 = sadd.s32 0, 0
    %s51 = smul.u32 2, %s50
    %p52 = scmp.eq.s32.totalorder 0, 0
    // Predicated region
    $region18: #{tpu_custom_call.1} parent=1 // pred_check
      %p53 = pneg %p52
    $region19: #{tpu_custom_call.1} parent=1 // pred_check_branch
      %55 = sbr.rel (%p53) target = $region21
    $region20: #{tpu_custom_call.1} parent=1 // pred_region
      %56 = vst [vmem:[#allocation2] sm:$0x1] 0.0
    $region21: #{tpu_custom_call.1} parent=1 // pred_fallthru
      _
    %v57 = vld [vmem:[#allocation3] sm:$0xff]
    %v58 = vld [vmem:[#allocation3 + $0x8] sm:$0xff]
    %v59 = vld [vmem:[#allocation6] sm:$0xff]
    %v60 = vld [vmem:[#allocation6 + $0x8] sm:$0xff]
    %v61 = vsub.f32 %v57, %v59
    %v62 = vsub.f32 %v58, %v60
    %v63 = vmul.f32 %v61, 0.15915494
    %v64 = vmul.f32 %v62, 0.15915494
    %v65 = vround.ne.pseudo %v63
    %v66 = vround.ne.pseudo %v64
    %v67 = vmul.f32 %v65, 6.2831855
    %v68 = vmul.f32 %v66, 6.2831855
    %v69 = vsub.f32 %v61, %v67
    %v70 = vsub.f32 %v62, %v68
    %v71 = vmul.f32 %v69, %v69
    %v72 = vmul.f32 %v70, %v70
    %v73 = vld [vmem:[#allocation2] sm:$0x1]
    %v74 = vadd.f32 %v71, %v72
    %v75 = vrot.slane %v74, 4
    %v76 = vadd.f32 %v74, %v75
    %v77 = vrot.slane %v76, 2
    %v78 = vadd.f32 %v76, %v77
    %v79 = vrot.slane %v78, 1
    %v80 = vadd.f32 %v78, %v79
    %v81 = vadd.f32 %v73, %v80
    %82 = vst [vmem:[#allocation2] sm:$0x1] %v81
    // Predicated region
    $region22: #{tpu_custom_call.1} parent=1 // pred_check
      %p83 = pneg %p52
    $region23: #{tpu_custom_call.1} parent=1 // pred_check_branch
      %85 = sbr.rel (%p83) target = $region25
    $region24: #{tpu_custom_call.1} parent=1 // pred_region
      %v86 = vld [vmem:[#allocation2] sm:$0x1]
      %87 = vst [vmem:[#allocation8] sm:$0x1] %v86
    $region25: #{tpu_custom_call.1} parent=1 // pred_fallthru
      _
    // Predicated region
    $region26: #{tpu_custom_call.1} parent=1 // pred_check
      _
    $region27: #{tpu_custom_call.1} parent=1 // pred_check_branch
      %89 = sbr.rel (0) target = $region29
    $region28: #{tpu_custom_call.1} parent=1 // pred_region
      %s91 = ssub.s32 16, 16
      %92 = vsyncadd [#allocation5], %s91
      %s94 = sshll.u32 [#allocation8], 4
      %s95 = int_to_ptr.vmem [resolvable:$true] %s94
      %97 = dma.vmem_to_hbm [thread:$0]  %s95, 16, %s2, [#allocation5]
    $region29: #{tpu_custom_call.1} parent=1 // pred_fallthru
      _
    // Predicated region
    $region30: #{tpu_custom_call.1} parent=1 // pred_check
      _
    $region31: #{tpu_custom_call.1} parent=1 // pred_check_branch
      %99 = sbr.rel (0) target = $region33
    $region32: #{tpu_custom_call.1} parent=1 // pred_region
      %100 = dma.done [#allocation5], 16
    $region33: #{tpu_custom_call.1} parent=1 // pred_fallthru
      _
    %101 = vsyncpa [#allocation4], 1
    %102 = vsyncpa [#allocation7], 1
    %103 = vsyncpa [#allocation5], 1

</llo_original>
